<compile_context>
chip_gen: v6e
topology: v6e:2x2x1
jax: 0.10.0
libtpu: 0.0.40
codegen_flags: <defaults>
</compile_context>

<pallas_src>
import functools

import jax
import jax.numpy as jnp
from jax.experimental import pallas as pl
from jax.experimental.pallas import tpu as pltpu


def _mean_max_linear_kernel(h_ref, w_mean_ref, w_max_ref, b_ref, o_ref,
                            sum_acc, max_acc, arg_acc, *,
                            seq_len, mask_seq):
    k = pl.program_id(1)
    num_k = pl.num_programs(1)
    ts = h_ref.shape[1]  # static seq-tile size

    @pl.when(k == 0)
    def _init():
        sum_acc[...] = jnp.zeros(sum_acc.shape, sum_acc.dtype)
        max_acc[...] = jnp.full(max_acc.shape, -jnp.inf, max_acc.dtype)
        arg_acc[...] = jnp.zeros(arg_acc.shape, arg_acc.dtype)

    # Tile stays in its native dtype (e.g. bf16) -- no full-tile f32 upcast.
    h = h_ref[...]                                               # [tb, ts, H]

    # seq-position iota (also reused for boundary masking below)
    seq_idx = jax.lax.broadcasted_iota(jnp.int32, h.shape, 1)    # [tb, ts, H]

    if mask_seq:
        # ceil-div grid: the last seq tile reads past S; mask padded rows.
        valid = (k * ts + seq_idx) < seq_len
        h_sum = jnp.where(valid, h, jnp.zeros((), h.dtype))
        h_max = jnp.where(valid, h, jnp.full((), -jnp.inf, h.dtype))
    else:
        h_sum = h
        h_max = h

    # Mean branch: widen to f32 only inside the reduction.
    sum_acc[...] += jnp.sum(h_sum, axis=1, dtype=jnp.float32)    # [tb, H]

    # Per-tile max and FIRST-occurrence argmax, in native dtype (max/eq on
    # bf16 values are exact).
    tile_max = jnp.max(h_max, axis=1)                            # [tb, H]
    masked_idx = jnp.where(h_max == tile_max[:, None, :], seq_idx, ts)
    tile_arg = jnp.min(masked_idx, axis=1) + k * ts              # [tb, H] i32

    # Strictly-greater carry preserves first-occurrence across seq tiles.
    tile_max_f32 = tile_max.astype(jnp.float32)    # tiny [tb, H] cast only
    update = tile_max_f32 > max_acc[...]
    arg_acc[...] = jnp.where(update, tile_arg, arg_acc[...])
    max_acc[...] = jnp.where(update, tile_max_f32, max_acc[...])

    @pl.when(k == num_k - 1)
    def _finalize():
        mean_p = sum_acc[...] * (1.0 / seq_len)                  # [tb, H]
        # `_, max_emb = torch.max(x, 1)` keeps the ARGMAX INDICES (as float),
        # faithfully reproducing the PyTorch module.
        argmax_p = arg_acc[...].astype(jnp.float32)              # [tb, H]
        # dropout is identity at inference
        # cat([mean, argmax], -1) @ W^T + b == mean @ W_mean + argmax @ W_max + b
        out = (jnp.dot(mean_p, w_mean_ref[...],
                       preferred_element_type=jnp.float32)
               + jnp.dot(argmax_p, w_max_ref[...],
                         preferred_element_type=jnp.float32)
               + b_ref[...])                                     # [tb, L]
        o_ref[...] = out


def _default_vmem_limit():
    try:
        cap = int(pltpu.get_tpu_info().vmem_capacity_bytes)
    except Exception:
        cap = 64 * 1024 * 1024        # conservative fallback (v7x per-TC VMEM)
    # Never request the whole physical VMEM; leave Mosaic-internal headroom.
    return max(32 * 1024 * 1024, min(cap - 16 * 1024 * 1024, 96 * 1024 * 1024))


def _pick_batch_tile(B, pref=8):
    if B <= 8:
        return B                      # block == full batch dim (always legal)
    # Multiple of 8 (output-block sublane rule) and <= B // 2, so the
    # "parallel" batch axis has >= 2 grid steps (v7x megacore: 2 TCs/chip).
    return max(8, (min(pref, B // 2) // 8) * 8)


def _pick_seq_tile(S, tb, H, itemsize, vmem_limit, pref=1024):
    align = max(8, 32 // max(itemsize, 1))     # 8 for f32, 16 for bf16
    # per seq-row VMEM cost: activation (double-buffered) plus ~8 B/elem of
    # int32 intermediates from the argmax path (iota / masked index).
    per_row = tb * H * (2 * itemsize + 8)
    cap_rows = max(align, (vmem_limit // 3) // max(per_row, 1))
    ts = min(S, pref, cap_rows)
    if ts >= S:
        return S                      # block == full seq dim (always legal)
    return max(align, (ts // align) * align)


def mean_max_pooling_head(last_hidden_state, weight, bias, *,
                          tb=None, ts=None, seq_buffers=None,
                          vmem_limit_bytes=None):
    """last_hidden_state: [B, S, H] (any float dtype, e.g. bf16 from backbone)
       weight:            [num_labels, 2H] f32 (PyTorch nn.Linear layout)
       bias:              [num_labels] f32
       returns:           [B, num_labels] f32
    """
    B, S, H = last_hidden_state.shape
    L = weight.shape[0]

    if vmem_limit_bytes is None:
        vmem_limit_bytes = _default_vmem_limit()
    if tb is None:
        tb = _pick_batch_tile(B)
    if ts is None:
        ts = _pick_seq_tile(S, tb, H, last_hidden_state.dtype.itemsize,
                            vmem_limit_bytes)

    # Pre-split the Linear weight so no in-kernel concat is needed.
    w_t = jnp.asarray(weight, jnp.float32).T                     # [2H, L]
    w_mean = w_t[:H]                                             # [H, L]
    w_max = w_t[H:]                                              # [H, L]
    b2d = jnp.asarray(bias, jnp.float32).reshape(1, L)

    mask_seq = (S % ts) != 0          # static: masking compiled out otherwise
    kernel = functools.partial(_mean_max_linear_kernel,
                               seq_len=S, mask_seq=mask_seq)

    act_spec_kwargs = {}
    if seq_buffers is not None and seq_buffers > 2:
        # Optional deeper pipelining for v5e/v6e (128 MiB VMEM) if xprof shows
        # exposed DMA at batch-tile boundaries.  Off by default.
        act_spec_kwargs["pipeline_mode"] = pl.Buffered(int(seq_buffers))
    act_spec = pl.BlockSpec((tb, ts, H), lambda i, k: (i, k, 0),
                            **act_spec_kwargs)

    return pl.pallas_call(
        kernel,
        out_shape=jax.ShapeDtypeStruct((B, L), jnp.float32),
        grid_spec=pltpu.PrefetchScalarGridSpec(
            num_scalar_prefetch=0,
            grid=(pl.cdiv(B, tb), pl.cdiv(S, ts)),
            in_specs=[
                # activation tile, streamed over (batch, seq)
                act_spec,
                # weights / bias: constant index_map -> fetched once, resident
                pl.BlockSpec((H, L), lambda i, k: (0, 0)),
                pl.BlockSpec((H, L), lambda i, k: (0, 0)),
                pl.BlockSpec((1, L), lambda i, k: (0, 0)),
            ],
            out_specs=pl.BlockSpec((tb, L), lambda i, k: (i, 0)),
            scratch_shapes=[
                pltpu.VMEM((tb, H), jnp.float32),   # running sum
                pltpu.VMEM((tb, H), jnp.float32),   # running max value
                pltpu.VMEM((tb, H), jnp.int32),     # running argmax index
            ],
        ),
        compiler_params=pltpu.CompilerParams(
            dimension_semantics=("parallel", "arbitrary"),
            vmem_limit_bytes=int(vmem_limit_bytes),
        ),
    )(last_hidden_state, w_mean, w_max, b2d)


def _reference(last_hidden_state, weight, bias):
    x = jnp.asarray(last_hidden_state, jnp.float32)
    mean_p = jnp.mean(x, axis=1)
    argmax_p = jnp.argmax(x, axis=1).astype(jnp.float32)
    feats = jnp.concatenate([mean_p, argmax_p], axis=1)
    return feats @ jnp.asarray(weight, jnp.float32).T + bias


if __name__ == "__main__":
    B, S, H, num_labels = 2, 8, 32, 4

    key = jax.random.PRNGKey(0)
    k_h, k_w, k_b, k_h2, k_h3, k_h4 = jax.random.split(key, 6)

    # Synthetic "last_hidden_state" standing in for AutoModel(...)[0].
    last_hidden_state = jax.random.normal(k_h, (B, S, H), dtype=jnp.float32)

    # Deterministic nn.Linear(2H, num_labels) init: U(-1/sqrt(fan_in), ...).
    fan_in = 2 * H
    bound = 1.0 / (fan_in ** 0.5)
    weight = jax.random.uniform(k_w, (num_labels, 2 * H), jnp.float32, -bound, bound)
    bias = jax.random.uniform(k_b, (num_labels,), jnp.float32, -bound, bound)

    # 1) Single-tile case (f32).
    out = jax.block_until_ready(mean_max_pooling_head(last_hidden_state, weight, bias))
    ref = _reference(last_hidden_state, weight, bias)
    assert out.shape == (B, num_labels)
    assert jnp.allclose(out, ref, atol=1e-3, rtol=1e-3), (out, ref)

    # 2) Multi-seq-tile, bf16 activations (native-dtype max/argmax path,
    #    f32 widen only inside the sum reduction).
    S2 = 32
    h2 = jax.random.normal(k_h2, (B, S2, H), dtype=jnp.float32).astype(jnp.bfloat16)
    out2 = jax.block_until_ready(mean_max_pooling_head(h2, weight, bias, ts=16))
    ref2 = _reference(h2, weight, bias)
    assert jnp.allclose(out2, ref2, atol=1e-3, rtol=1e-3), (out2, ref2)

    # 3) Non-divisible seq length: ceil-div grid + in-kernel masking of the
    #    padded rows of the last seq tile.
    S3 = 20
    h3 = jax.random.normal(k_h3, (B, S3, H), dtype=jnp.float32)
    out3 = jax.block_until_ready(mean_max_pooling_head(h3, weight, bias, ts=8))
    ref3 = _reference(h3, weight, bias)
    assert jnp.allclose(out3, ref3, atol=1e-3, rtol=1e-3), (out3, ref3)

    # 4) Larger batch: default tb=8 gives >=2 "parallel" batch grid steps
    #    (megacore sharding on v7x).
    B4, S4 = 16, 16
    h4 = jax.random.normal(k_h4, (B4, S4, H), dtype=jnp.float32)
    out4 = jax.block_until_ready(mean_max_pooling_head(h4, weight, bias))
    ref4 = _reference(h4, weight, bias)
    assert out4.shape == (B4, num_labels)
    assert jnp.allclose(out4, ref4, atol=1e-3, rtol=1e-3), (out4, ref4)

    print("KERNEL_OK")
</pallas_src>

<mosaic_0001>
module attributes {stable_mosaic.version = 11 : i64} {
  func.func @_mean_max_linear_kernel(%arg0: i32, %arg1: i32, %arg2: memref<2x8x32xf32, #tpu.memory_space<vmem>>, %arg3: memref<32x4xf32, #tpu.memory_space<vmem>>, %arg4: memref<32x4xf32, #tpu.memory_space<vmem>>, %arg5: memref<1x4xf32, #tpu.memory_space<vmem>>, %arg6: memref<2x4xf32, #tpu.memory_space<vmem>>, %arg7: memref<2x32xf32, #tpu.memory_space<vmem>>, %arg8: memref<2x32xf32, #tpu.memory_space<vmem>>, %arg9: memref<2x32xi32, #tpu.memory_space<vmem>>) attributes {dimension_semantics = [#tpu.dimension_semantics<parallel>, #tpu.dimension_semantics<arbitrary>], iteration_bounds = array<i64: 1, 1>, scalar_prefetch = 0 : i64, scratch_operands = 3 : i64, tpu.core_type = #tpu.core_type<tc>, window_params = [{transform_indices = @transform_0, window_bounds = array<i64: 2, 8, 32>}, {pipeline_mode = #tpu.pipeline_mode<synchronous>, transform_indices = @transform_1, window_bounds = array<i64: 32, 4>}, {pipeline_mode = #tpu.pipeline_mode<synchronous>, transform_indices = @transform_2, window_bounds = array<i64: 32, 4>}, {pipeline_mode = #tpu.pipeline_mode<synchronous>, transform_indices = @transform_3, window_bounds = array<i64: 1, 4>}, {transform_indices = @transform_4, window_bounds = array<i64: 2, 4>}]} {
    %c0_i32 = arith.constant 0 : i32
    %0 = arith.cmpi eq, %arg1, %c0_i32 : i32
    %1 = arith.extui %0 : i1 to i32
    %c0_i32_0 = arith.constant 0 : i32
    %2 = arith.cmpi ne, %1, %c0_i32_0 : i32
    scf.if %2 {
      %cst_22 = arith.constant 0.000000e+00 : f32
      %30 = vector.broadcast %cst_22 : f32 to vector<2x32xf32>
      %c0_23 = arith.constant 0 : index
      %c0_24 = arith.constant 0 : index
      %31 = vector.load %arg7[%c0_23, %c0_24] : memref<2x32xf32, #tpu.memory_space<vmem>>, vector<2x32xf32>
      tpu.vector_store %arg7[%c0_23, %c0_24], %30 {strides = array<i32>} : memref<2x32xf32, #tpu.memory_space<vmem>>, vector<2x32xf32>,
      %cst_25 = arith.constant 0xFF800000 : f32
      %32 = vector.broadcast %cst_25 : f32 to vector<2x32xf32>
      %c0_26 = arith.constant 0 : index
      %c0_27 = arith.constant 0 : index
      %33 = vector.load %arg8[%c0_26, %c0_27] : memref<2x32xf32, #tpu.memory_space<vmem>>, vector<2x32xf32>
      tpu.vector_store %arg8[%c0_26, %c0_27], %32 {strides = array<i32>} : memref<2x32xf32, #tpu.memory_space<vmem>>, vector<2x32xf32>,
      %c0_i32_28 = arith.constant 0 : i32
      %34 = vector.broadcast %c0_i32_28 : i32 to vector<2x32xi32>
      %c0_29 = arith.constant 0 : index
      %c0_30 = arith.constant 0 : index
      %35 = vector.load %arg9[%c0_29, %c0_30] : memref<2x32xi32, #tpu.memory_space<vmem>>, vector<2x32xi32>
      tpu.vector_store %arg9[%c0_29, %c0_30], %34 {strides = array<i32>} : memref<2x32xi32, #tpu.memory_space<vmem>>, vector<2x32xi32>,
    } else {
    }
    %c0 = arith.constant 0 : index
    %c0_1 = arith.constant 0 : index
    %c0_2 = arith.constant 0 : index
    %3 = vector.load %arg2[%c0, %c0_1, %c0_2] : memref<2x8x32xf32, #tpu.memory_space<vmem>>, vector<2x8x32xf32>
    %4 = tpu.iota {dimensions = array<i32: 1>} : vector<2x8x32xi32>
    %c0_3 = arith.constant 0 : index
    %c0_4 = arith.constant 0 : index
    %5 = vector.load %arg7[%c0_3, %c0_4] : memref<2x32xf32, #tpu.memory_space<vmem>>, vector<2x32xf32>
    %cst = arith.constant dense<0.000000e+00> : vector<2x32xf32>
    %6 = vector.multi_reduction <add>, %3, %cst [1] : vector<2x8x32xf32> to vector<2x32xf32>
    %7 = arith.addf %5, %6 : vector<2x32xf32>
    %c0_5 = arith.constant 0 : index
    %c0_6 = arith.constant 0 : index
    %8 = vector.load %arg7[%c0_5, %c0_6] : memref<2x32xf32, #tpu.memory_space<vmem>>, vector<2x32xf32>
    tpu.vector_store %arg7[%c0_5, %c0_6], %7 {strides = array<i32>} : memref<2x32xf32, #tpu.memory_space<vmem>>, vector<2x32xf32>,
    %cst_7 = arith.constant dense<0xFF800000> : vector<2x32xf32>
    %9 = vector.multi_reduction <maximumf>, %3, %cst_7 [1] : vector<2x8x32xf32> to vector<2x32xf32>
    %10 = vector.shape_cast %9 : vector<2x32xf32> to vector<2x1x32xf32>
    %11 = vector.broadcast %10 : vector<2x1x32xf32> to vector<2x8x32xf32>
    %12 = arith.cmpf oeq, %3, %11 : vector<2x8x32xf32>
    %c8_i32 = arith.constant 8 : i32
    %13 = vector.broadcast %c8_i32 : i32 to vector<2x8x32xi32>
    %14 = arith.select %12, %4, %13 : vector<2x8x32xi1>, vector<2x8x32xi32>
    %cst_8 = arith.constant dense<2147483647> : vector<2x32xi32>
    %15 = vector.multi_reduction <minsi>, %14, %cst_8 [1] : vector<2x8x32xi32> to vector<2x32xi32>
    %c8_i32_9 = arith.constant 8 : i32
    %16 = arith.muli %arg1, %c8_i32_9 : i32
    %17 = vector.broadcast %16 : i32 to vector<2x32xi32>
    %18 = arith.addi %15, %17 : vector<2x32xi32>
    %c0_10 = arith.constant 0 : index
    %c0_11 = arith.constant 0 : index
    %19 = vector.load %arg8[%c0_10, %c0_11] : memref<2x32xf32, #tpu.memory_space<vmem>>, vector<2x32xf32>
    %20 = arith.cmpf ogt, %9, %19 : vector<2x32xf32>
    %c0_12 = arith.constant 0 : index
    %c0_13 = arith.constant 0 : index
    %21 = vector.load %arg9[%c0_12, %c0_13] : memref<2x32xi32, #tpu.memory_space<vmem>>, vector<2x32xi32>
    %22 = arith.select %20, %18, %21 : vector<2x32xi1>, vector<2x32xi32>
    %c0_14 = arith.constant 0 : index
    %c0_15 = arith.constant 0 : index
    %23 = vector.load %arg9[%c0_14, %c0_15] : memref<2x32xi32, #tpu.memory_space<vmem>>, vector<2x32xi32>
    tpu.vector_store %arg9[%c0_14, %c0_15], %22 {strides = array<i32>} : memref<2x32xi32, #tpu.memory_space<vmem>>, vector<2x32xi32>,
    %c0_16 = arith.constant 0 : index
    %c0_17 = arith.constant 0 : index
    %24 = vector.load %arg8[%c0_16, %c0_17] : memref<2x32xf32, #tpu.memory_space<vmem>>, vector<2x32xf32>
    %25 = arith.select %20, %9, %24 : vector<2x32xi1>, vector<2x32xf32>
    %c0_18 = arith.constant 0 : index
    %c0_19 = arith.constant 0 : index
    %26 = vector.load %arg8[%c0_18, %c0_19] : memref<2x32xf32, #tpu.memory_space<vmem>>, vector<2x32xf32>
    tpu.vector_store %arg8[%c0_18, %c0_19], %25 {strides = array<i32>} : memref<2x32xf32, #tpu.memory_space<vmem>>, vector<2x32xf32>,
    %c0_i32_20 = arith.constant 0 : i32
    %27 = arith.cmpi eq, %arg1, %c0_i32_20 : i32
    %28 = arith.extui %27 : i1 to i32
    %c0_i32_21 = arith.constant 0 : i32
    %29 = arith.cmpi ne, %28, %c0_i32_21 : i32
    scf.if %29 {
      %c0_22 = arith.constant 0 : index
      %c0_23 = arith.constant 0 : index
      %30 = vector.load %arg7[%c0_22, %c0_23] : memref<2x32xf32, #tpu.memory_space<vmem>>, vector<2x32xf32>
      %cst_24 = arith.constant 1.250000e-01 : f32
      %31 = vector.broadcast %cst_24 : f32 to vector<2x32xf32>
      %32 = arith.mulf %30, %31 : vector<2x32xf32>
      %c0_25 = arith.constant 0 : index
      %c0_26 = arith.constant 0 : index
      %33 = vector.load %arg9[%c0_25, %c0_26] : memref<2x32xi32, #tpu.memory_space<vmem>>, vector<2x32xi32>
      %34 = arith.sitofp %33 : vector<2x32xi32> to vector<2x32xf32>
      %c0_27 = arith.constant 0 : index
      %c0_28 = arith.constant 0 : index
      %35 = vector.load %arg3[%c0_27, %c0_28] : memref<32x4xf32, #tpu.memory_space<vmem>>, vector<32x4xf32>
      %cst_29 = arith.constant dense<0.000000e+00> : vector<2x4xf32>
      %36 = tpu.matmul %32, %35, %cst_29 {dimension_numbers = #tpu.dot_dimension_numbers<[1], [0], [0], [1], [0, 0, 1, 1], [], []>} : vector<2x32xf32>, vector<32x4xf32>, vector<2x4xf32> -> vector<2x4xf32>
      %c0_30 = arith.constant 0 : index
      %c0_31 = arith.constant 0 : index
      %37 = vector.load %arg4[%c0_30, %c0_31] : memref<32x4xf32, #tpu.memory_space<vmem>>, vector<32x4xf32>
      %cst_32 = arith.constant dense<0.000000e+00> : vector<2x4xf32>
      %38 = tpu.matmul %34, %37, %cst_32 {dimension_numbers = #tpu.dot_dimension_numbers<[1], [0], [0], [1], [0, 0, 1, 1], [], []>} : vector<2x32xf32>, vector<32x4xf32>, vector<2x4xf32> -> vector<2x4xf32>
      %39 = arith.addf %36, %38 : vector<2x4xf32>
      %c0_33 = arith.constant 0 : index
      %c0_34 = arith.constant 0 : index
      %40 = vector.load %arg5[%c0_33, %c0_34] : memref<1x4xf32, #tpu.memory_space<vmem>>, vector<1x4xf32>
      %41 = vector.broadcast %40 : vector<1x4xf32> to vector<2x4xf32>
      %42 = arith.addf %39, %41 : vector<2x4xf32>
      %c0_35 = arith.constant 0 : index
      %c0_36 = arith.constant 0 : index
      %43 = vector.load %arg6[%c0_35, %c0_36] : memref<2x4xf32, #tpu.memory_space<vmem>>, vector<2x4xf32>
      tpu.vector_store %arg6[%c0_35, %c0_36], %42 {strides = array<i32>} : memref<2x4xf32, #tpu.memory_space<vmem>>, vector<2x4xf32>,
    } else {
    }
    return
  }
  func.func @transform_0(%arg0: i32, %arg1: i32) -> (i32, i32, i32) {
    %c0_i32 = arith.constant 0 : i32
    %c0_i32_0 = arith.constant 0 : i32
    return %arg0, %arg1, %c0_i32 : i32, i32, i32
  }
  func.func @transform_1(%arg0: i32, %arg1: i32) -> (i32, i32) {
    %c0_i32 = arith.constant 0 : i32
    %c0_i32_0 = arith.constant 0 : i32
    %c0_i32_1 = arith.constant 0 : i32
    return %c0_i32, %c0_i32_0 : i32, i32
  }
  func.func @transform_2(%arg0: i32, %arg1: i32) -> (i32, i32) {
    %c0_i32 = arith.constant 0 : i32
    %c0_i32_0 = arith.constant 0 : i32
    %c0_i32_1 = arith.constant 0 : i32
    return %c0_i32, %c0_i32_0 : i32, i32
  }
  func.func @transform_3(%arg0: i32, %arg1: i32) -> (i32, i32) {
    %c0_i32 = arith.constant 0 : i32
    %c0_i32_0 = arith.constant 0 : i32
    %c0_i32_1 = arith.constant 0 : i32
    return %c0_i32, %c0_i32_0 : i32, i32
  }
  func.func @transform_4(%arg0: i32, %arg1: i32) -> (i32, i32) {
    %c0_i32 = arith.constant 0 : i32
    %c0_i32_0 = arith.constant 0 : i32
    return %arg0, %c0_i32 : i32, i32
  }
}

</mosaic_0001>

<llo_original>
// kernel: tpu_custom_call.1
$region0: #{tpu_custom_call.1}
  #allocation0 [shape = 'u32[]', space=smem, size = 0x4, offset = 0x4, fixed_abs, tag = 'smem constant byte address 0x4 - core index']
  #allocation1 [shape = 'u32[144,128]{1,0:T(1,128)}', space=vmem, size = 0x12000, scoped, tag = 'internal scratch']
  #allocation2 [shape = 'f32[2,32]{1,0:T(2,128)}', space=vmem, size = 0x400, scoped, tag = 'scratch operand']
  #allocation3 [shape = 'f32[2,32]{1,0:T(2,128)}', space=vmem, size = 0x400, scoped, tag = 'scratch operand']
  #allocation4 [shape = 's32[2,32]{1,0:T(2,128)}', space=vmem, size = 0x400, scoped, tag = 'scratch operand']
  %s0 = inlined_call_operand.vmem [shape: f32[2,8,32], index: 0, kind: input, shape index: {}]
  %s1 = inlined_call_operand.vmem [shape: f32[32,4], index: 1, kind: input, shape index: {}]
  %s2 = inlined_call_operand.vmem [shape: f32[32,4], index: 2, kind: input, shape index: {}]
  %s3 = inlined_call_operand.vmem [shape: f32[1,4], index: 3, kind: input, shape index: {}]
  %s4 = inlined_call_operand.hbm [shape: f32[2,4], index: 4, kind: output, shape index: {}]
  %s5 = sld [smem:[#allocation0]]
  $region34: #{tpu_custom_call.1} parent=0
    _
  %s7 = ssub.s32 1, %s5
  %s8 = scalar_select 0, %s7, %s5
  $region1: #{tpu_custom_call.1} parent=0
    #allocation5 [shape = 'u8[1024]{0}', space=vmem, size = 0x400, scoped, tag = 'output window, operand 0, single buffered']
    #allocation6 [shape = 's32[1]{0}', space=sflag, size = 0x4, scoped, tag = 'scoped memory for tpu_custom_call.1']
    %9 = vsyncpa [#allocation6], 0
    // Predicated region
    $region2: #{tpu_custom_call.1} parent=1 // pred_check
      _
    $region3: #{tpu_custom_call.1} parent=1 // pred_check_branch
      %11 = sbr.rel (0) target = $region5
    $region4: #{tpu_custom_call.1} parent=1 // pred_region
      _
    $region5: #{tpu_custom_call.1} parent=1 // pred_fallthru
      _
    // Predicated region
    $region6: #{tpu_custom_call.1} parent=1 // pred_check
      _
    $region7: #{tpu_custom_call.1} parent=1 // pred_check_branch
      %13 = sbr.rel (0) target = $region9
    $region8: #{tpu_custom_call.1} parent=1 // pred_region
      _
    $region9: #{tpu_custom_call.1} parent=1 // pred_fallthru
      _
    // Predicated region
    $region10: #{tpu_custom_call.1} parent=1 // pred_check
      _
    $region11: #{tpu_custom_call.1} parent=1 // pred_check_branch
      %15 = sbr.rel (0) target = $region13
    $region12: #{tpu_custom_call.1} parent=1 // pred_region
      _
    $region13: #{tpu_custom_call.1} parent=1 // pred_fallthru
      _
    // Predicated region
    $region14: #{tpu_custom_call.1} parent=1 // pred_check
      _
    $region15: #{tpu_custom_call.1} parent=1 // pred_check_branch
      %17 = sbr.rel (0) target = $region17
    $region16: #{tpu_custom_call.1} parent=1 // pred_region
      _
    $region17: #{tpu_custom_call.1} parent=1 // pred_fallthru
      _
    %p18 = scmp.eq.s32.totalorder 0, 0
    // Predicated region
    $region18: #{tpu_custom_call.1} parent=1 // pred_check
      %p19 = pneg %p18
    $region19: #{tpu_custom_call.1} parent=1 // pred_check_branch
      %21 = sbr.rel (%p19) target = $region21
    $region20: #{tpu_custom_call.1} parent=1 // pred_region
      %vm22 = vcmask 254976
      %23 = vst.msk [vmem:[#allocation2] sm:$0x3] %vm22, 0.0
      %24 = vst.msk [vmem:[#allocation3] sm:$0x3] %vm22, -inf
      %25 = vst.msk [vmem:[#allocation4] sm:$0x3] %vm22, 0
    $region21: #{tpu_custom_call.1} parent=1 // pred_fallthru
      _
    %v26 = vld [vmem:[%s0] sm:$0xff]
    %v27 = vld [vmem:[%s0 + $0x8] sm:$0xff]
    %v28 = vlaneseq
    %v29 = vshrl.u32 %v28, 7
    %v30 = vld [vmem:[#allocation2] sm:$0x3]
    %vm31 = vcmask 261120
    %v32 = vsel %vm31, %v26, 0.0
    %v33 = vrot.slane %v32, 4
    %v34 = vadd.f32 %v32, %v33
    %v35 = vrot.slane %v34, 2
    %v36 = vadd.f32 %v34, %v35
    %v37 = vrot.slane %v36, 1
    %v38 = vadd.f32 %v36, %v37
    %v39 = vsel %vm31, %v27, 0.0
    %v40 = vrot.slane %v39, 4
    %v41 = vadd.f32 %v39, %v40
    %v42 = vrot.slane %v41, 2
    %v43 = vadd.f32 %v41, %v42
    %v44 = vrot.slane %v43, 1
    %v45 = vadd.f32 %v43, %v44
    %vm48 = vcmask 1041409
    %v49 = vsel %vm48, %v45, %v38
    %v51 = vadd.f32 %v30, %v49
    %vm52 = vcmask 254976
    %53 = vst.msk [vmem:[#allocation2] sm:$0x3] %vm52, %v51
    %v54 = vsel %vm31, %v26, -inf
    %v55 = vrot.slane %v54, 4
    %v56 = vmax.f32 %v54, %v55
    %v57 = vrot.slane %v56, 2
    %v58 = vmax.f32 %v56, %v57
    %v59 = vrot.slane %v58, 1
    %v60 = vmax.f32 %v58, %v59
    %v61 = vsel %vm31, %v27, -inf
    %v62 = vrot.slane %v61, 4
    %v63 = vmax.f32 %v61, %v62
    %v64 = vrot.slane %v63, 2
    %v65 = vmax.f32 %v63, %v64
    %v66 = vrot.slane %v65, 1
    %v67 = vmax.f32 %v65, %v66
    %vm68 = vcmp.eq.f32.partialorder %v26, %v60
    %vm69 = vcmp.eq.f32.partialorder %v27, %v67
    %v70 = vsel %vm68, %v29, 8
    %v71 = vsel %vm69, %v29, 8
    %v72 = vsel %vm31, %v70, 2147483647
    %v73 = vrot.slane %v72, 4
    %vm74 = vcmp.lt.s32.totalorder %v72, %v73
    %v75 = vsel %vm74, %v72, %v73
    %v76 = vrot.slane %v75, 2
    %vm77 = vcmp.lt.s32.totalorder %v75, %v76
    %v78 = vsel %vm77, %v75, %v76
    %v79 = vrot.slane %v78, 1
    %vm80 = vcmp.lt.s32.totalorder %v78, %v79
    %v81 = vsel %vm80, %v78, %v79
    %v82 = vsel %vm31, %v71, 2147483647
    %v83 = vrot.slane %v82, 4
    %vm84 = vcmp.lt.s32.totalorder %v82, %v83
    %v85 = vsel %vm84, %v82, %v83
    %v86 = vrot.slane %v85, 2
    %vm87 = vcmp.lt.s32.totalorder %v85, %v86
    %v88 = vsel %vm87, %v85, %v86
    %v89 = vrot.slane %v88, 1
    %vm90 = vcmp.lt.s32.totalorder %v88, %v89
    %v91 = vsel %vm90, %v88, %v89
    %s92 = smul.u32 0, 8
    %v93 = vstv %s92
    %v94 = vadd.s32 %v81, %v93
    %v95 = vadd.s32 %v91, %v93
    %v96 = vld [vmem:[#allocation3] sm:$0x3]
    %v98 = vrot.slane %v96, 1
    %vm101 = vcmp.gt.f32.partialorder %v60, %v96
    %vm102 = vcmp.gt.f32.partialorder %v67, %v98
    %v103 = vld [vmem:[#allocation4] sm:$0x3]
    %v104 = vrot.slane %v103, 1
    %v105 = vsel %vm101, %v94, %v103
    %v106 = vsel %vm102, %v95, %v104
    %v107 = vrot.slane %v106, 7
    %v108 = vsel %vm48, %v107, %v105
    %109 = vst.msk [vmem:[#allocation4] sm:$0x3] %vm52, %v108
    %v110 = vld [vmem:[#allocation3] sm:$0x3]
    %v112 = vrot.slane %v110, 1
    %v115 = vsel %vm101, %v60, %v110
    %v116 = vsel %vm102, %v67, %v112
    %v119 = vrot.slane %v116, 7
    %v120 = vsel %vm48, %v119, %v115
    %122 = vst.msk [vmem:[#allocation3] sm:$0x3] %vm52, %v120
    // Predicated region
    $region22: #{tpu_custom_call.1} parent=1 // pred_check
      %p123 = pneg %p18
    $region23: #{tpu_custom_call.1} parent=1 // pred_check_branch
      %125 = sbr.rel (%p123) target = $region25
    $region24: #{tpu_custom_call.1} parent=1 // pred_region
      %v126 = vld [vmem:[#allocation2] sm:$0x3]
      %v127 = vmul.f32 %v126, 0.125
      %v128 = vld [vmem:[#allocation4] sm:$0x3]
      %v129 = vcvt.s32.f32 %v128
      %v130 = vld [vmem:[%s1] sm:$0xff]
      %v131 = vld [vmem:[%s1 + $0x8] sm:$0xff]
      %v132 = vld [vmem:[%s1 + $0x10] sm:$0xff]
      %v133 = vld [vmem:[%s1 + $0x18] sm:$0xff]
      %v134 = vld [vmem:[%s2] sm:$0xff]
      %v135 = vld [vmem:[%s2 + $0x8] sm:$0xff]
      %v136 = vld [vmem:[%s2 + $0x10] sm:$0xff]
      %v137 = vld [vmem:[%s2 + $0x18] sm:$0xff]
      %v139 = vsel %vm31, %v129, 0
      %141 = vmatprep.subr.mxu0 0.0
      %142 = vmatpush1.msra.mxu0 0.0
      %143 = vmatprep.subr.mxu0 0.0
      %144 = vmatpush1.msra.mxu0 0.0
      %145 = vmatprep.subr.mxu0 0.0
      %146 = vmatpush1.msra.mxu0 0.0
      %147 = vmatprep.subr.mxu0 0.0
      %148 = vmatpush1.msra.mxu0 0.0
      %149 = vmatprep.subr.mxu0 0.0
      %150 = vmatpush1.msra.mxu0 0.0
      %151 = vmatprep.subr.mxu0 0.0
      %152 = vmatpush1.msra.mxu0 0.0
      %153 = vmatprep.subr.mxu0 0.0
      %154 = vmatpush1.msra.mxu0 0.0
      %155 = vmatprep.subr.mxu0 0.0
      %156 = vmatpush1.msra.mxu0 0.0
      %157 = vmatprep.subr.mxu0 0.0
      %158 = vmatpush1.msra.mxu0 0.0
      %159 = vmatprep.subr.mxu0 0.0
      %160 = vmatpush1.msra.mxu0 0.0
      %161 = vmatprep.subr.mxu0 0.0
      %162 = vmatpush1.msra.mxu0 0.0
      %163 = vmatprep.subr.mxu0 0.0
      %164 = vmatpush1.msra.mxu0 0.0
      %165 = vmatprep.subr.mxu0 0.0
      %166 = vmatpush1.msra.mxu0 %v137
      %167 = vmatprep.subr.mxu0 0.0
      %168 = vmatpush1.msra.mxu0 %v136
      %169 = vmatprep.subr.mxu0 0.0
      %170 = vmatpush1.msra.mxu0 %v135
      %171 = vmatprep.subr.mxu0 0.0
      %172 = vmatpush1.msra.mxu0 %v134
      %173 = vmatprep.subr.mxu0 0.0
      %174 = vmatpush2.msra.mxu0 0.0
      %175 = vmatprep.subr.mxu0 0.0
      %176 = vmatpush2.msra.mxu0 0.0
      %177 = vmatprep.subr.mxu0 0.0
      %178 = vmatpush2.msra.mxu0 0.0
      %179 = vmatprep.subr.mxu0 0.0
      %180 = vmatpush2.msra.mxu0 0.0
      %181 = vmatprep.subr.mxu0 0.0
      %182 = vmatpush2.msra.mxu0 0.0
      %183 = vmatprep.subr.mxu0 0.0
      %184 = vmatpush2.msra.mxu0 0.0
      %185 = vmatprep.subr.mxu0 0.0
      %186 = vmatpush2.msra.mxu0 0.0
      %187 = vmatprep.subr.mxu0 0.0
      %188 = vmatpush2.msra.mxu0 0.0
      %189 = vmatprep.subr.mxu0 0.0
      %190 = vmatpush2.msra.mxu0 0.0
      %191 = vmatprep.subr.mxu0 0.0
      %192 = vmatpush2.msra.mxu0 0.0
      %193 = vmatprep.subr.mxu0 0.0
      %194 = vmatpush2.msra.mxu0 0.0
      %195 = vmatprep.subr.mxu0 0.0
      %196 = vmatpush2.msra.mxu0 0.0
      %197 = vmatprep.subr.mxu0 0.0
      %198 = vmatpush2.msra.mxu0 0.0
      %199 = vmatprep.subr.mxu0 0.0
      %200 = vmatpush2.msra.mxu0 0.0
      %201 = vmatprep.subr.mxu0 0.0
      %202 = vmatpush2.msra.mxu0 0.0
      %203 = vmatprep.subr.mxu0 0.0
      %204 = vmatpush2.msra.mxu0 0.0
      %205 = vmatprep.mubr.f32.mxu0 0.0
      %206 = vmatmul.mubr.f32.gmra.mxu0 %v139
      %v207 = vpop.f32.mrf.mxu0
      %v208 = vadd.f32 0.0, %v207
      %v209 = vpop.f32.mrf.mxu0
      %210 = vdwg.mxu0
      %v212 = vsel %vm31, %v127, 0
      %214 = vmatprep.subr.mxu0 0.0
      %215 = vmatpush1.msra.mxu0 0.0
      %216 = vmatprep.subr.mxu0 0.0
      %217 = vmatpush1.msra.mxu0 0.0
      %218 = vmatprep.subr.mxu0 0.0
      %219 = vmatpush1.msra.mxu0 0.0
      %220 = vmatprep.subr.mxu0 0.0
      %221 = vmatpush1.msra.mxu0 0.0
      %222 = vmatprep.subr.mxu0 0.0
      %223 = vmatpush1.msra.mxu0 0.0
      %224 = vmatprep.subr.mxu0 0.0
      %225 = vmatpush1.msra.mxu0 0.0
      %226 = vmatprep.subr.mxu0 0.0
      %227 = vmatpush1.msra.mxu0 0.0
      %228 = vmatprep.subr.mxu0 0.0
      %229 = vmatpush1.msra.mxu0 0.0
      %230 = vmatprep.subr.mxu0 0.0
      %231 = vmatpush1.msra.mxu0 0.0
      %232 = vmatprep.subr.mxu0 0.0
      %233 = vmatpush1.msra.mxu0 0.0
      %234 = vmatprep.subr.mxu0 0.0
      %235 = vmatpush1.msra.mxu0 0.0
      %236 = vmatprep.subr.mxu0 0.0
      %237 = vmatpush1.msra.mxu0 0.0
      %238 = vmatprep.subr.mxu0 0.0
      %239 = vmatpush1.msra.mxu0 %v133
      %240 = vmatprep.subr.mxu0 0.0
      %241 = vmatpush1.msra.mxu0 %v132
      %242 = vmatprep.subr.mxu0 0.0
      %243 = vmatpush1.msra.mxu0 %v131
      %244 = vmatprep.subr.mxu0 0.0
      %245 = vmatpush1.msra.mxu0 %v130
      %246 = vmatprep.subr.mxu0 0.0
      %247 = vmatpush2.msra.mxu0 0.0
      %248 = vmatprep.subr.mxu0 0.0
      %249 = vmatpush2.msra.mxu0 0.0
      %250 = vmatprep.subr.mxu0 0.0
      %251 = vmatpush2.msra.mxu0 0.0
      %252 = vmatprep.subr.mxu0 0.0
      %253 = vmatpush2.msra.mxu0 0.0
      %254 = vmatprep.subr.mxu0 0.0
      %255 = vmatpush2.msra.mxu0 0.0
      %256 = vmatprep.subr.mxu0 0.0
      %257 = vmatpush2.msra.mxu0 0.0
      %258 = vmatprep.subr.mxu0 0.0
      %259 = vmatpush2.msra.mxu0 0.0
      %260 = vmatprep.subr.mxu0 0.0
      %261 = vmatpush2.msra.mxu0 0.0
      %262 = vmatprep.subr.mxu0 0.0
      %263 = vmatpush2.msra.mxu0 0.0
      %264 = vmatprep.subr.mxu0 0.0
      %265 = vmatpush2.msra.mxu0 0.0
      %266 = vmatprep.subr.mxu0 0.0
      %267 = vmatpush2.msra.mxu0 0.0
      %268 = vmatprep.subr.mxu0 0.0
      %269 = vmatpush2.msra.mxu0 0.0
      %270 = vmatprep.subr.mxu0 0.0
      %271 = vmatpush2.msra.mxu0 0.0
      %272 = vmatprep.subr.mxu0 0.0
      %273 = vmatpush2.msra.mxu0 0.0
      %274 = vmatprep.subr.mxu0 0.0
      %275 = vmatpush2.msra.mxu0 0.0
      %276 = vmatprep.subr.mxu0 0.0
      %277 = vmatpush2.msra.mxu0 0.0
      %278 = vmatprep.mubr.f32.mxu0 0.0
      %279 = vmatmul.mubr.f32.gmra.mxu0 %v212
      %v280 = vpop.f32.mrf.mxu0
      %v281 = vadd.f32 %v208, %v280
      %v282 = vpop.f32.mrf.mxu0
      %283 = vdwg.mxu0
      %v284 = vld [vmem:[%s3] sm:$0x1]
      %v286 = vlaneseq
      %v287 = vshrl.u32 %v286, 7
      %v288 = vsub.s32 0, %v287
      %v289 = vrot.slane %v284, %v288
      %v291 = vadd.f32 %v281, %v289
      %vm292 = vcmask 25600
      %293 = vst.msk [vmem:[#allocation5] sm:$0x3] %vm292, %v291
    $region25: #{tpu_custom_call.1} parent=1 // pred_fallthru
      _
    // Predicated region
    $region26: #{tpu_custom_call.1} parent=1 // pred_check
      _
    $region27: #{tpu_custom_call.1} parent=1 // pred_check_branch
      %295 = sbr.rel (0) target = $region29
    $region28: #{tpu_custom_call.1} parent=1 // pred_region
      %s297 = ssub.s32 32, 32
      %298 = vsyncadd [#allocation6], %s297
      %s300 = sshll.u32 [#allocation5], 4
      %s301 = int_to_ptr.vmem [resolvable:$true] %s300
      %303 = dma.vmem_to_hbm [thread:$0]  %s301, 32, %s4, [#allocation6]
    $region29: #{tpu_custom_call.1} parent=1 // pred_fallthru
      _
    // Predicated region
    $region30: #{tpu_custom_call.1} parent=1 // pred_check
      _
    $region31: #{tpu_custom_call.1} parent=1 // pred_check_branch
      %305 = sbr.rel (0) target = $region33
    $region32: #{tpu_custom_call.1} parent=1 // pred_region
      %306 = dma.done [#allocation6], 32
    $region33: #{tpu_custom_call.1} parent=1 // pred_fallthru
      _
    %307 = vsyncpa [#allocation6], 1

</llo_original>
